<compile_context>
chip_gen: v5e
topology: v5e:2x2
jax: 0.10.0
libtpu: 0.0.40
codegen_flags: <defaults>
</compile_context>

<pallas_src>
import functools

import jax
import jax.numpy as jnp
from jax.experimental import pallas as pl
from jax.experimental.pallas import tpu as pltpu

LN_EPS = 1e-5  # torch.nn.LayerNorm default


def critic_kernel(obs_ref, act_ref,
                  w_obs_ref, w_act_ref, b_tr_ref, ln_g_ref, ln_b_ref,
                  w_heads_ref, b_heads_ref, w_out_ref, b_out_ref,
                  q_ref):
    # ---- trunk: Linear -> LayerNorm -> Tanh (all f32; tiny K, LN needs f32) ----
    h0 = (jnp.dot(obs_ref[...], w_obs_ref[...], preferred_element_type=jnp.float32)
          + jnp.dot(act_ref[...], w_act_ref[...], preferred_element_type=jnp.float32)
          + b_tr_ref[...])

    # LayerNorm statistics in one pass: mean = E[x], var = E[x^2] - mean^2.
    inv_n = 1.0 / h0.shape[-1]
    s1 = jnp.sum(h0, axis=-1, keepdims=True)
    s2 = jnp.sum(h0 * h0, axis=-1, keepdims=True)
    mean = s1 * inv_n
    var = jnp.maximum(s2 * inv_n - mean * mean, 0.0)
    h = jnp.tanh((h0 - mean) * jax.lax.rsqrt(var + LN_EPS)
                 * ln_g_ref[...] + ln_b_ref[...])

    # ---- both Q heads, first Linear fused: (TILE_B, H) x (H, 2H), bf16 MXU ----
    z = jnp.dot(h.astype(jnp.bfloat16), w_heads_ref[...],
                preferred_element_type=jnp.float32) + b_heads_ref[...]
    z = jnp.maximum(z, 0.0)

    # ---- fused block-diagonal output Linear: (TILE_B, 2H) x (2H, 2) -> (TILE_B, 2)
    q_ref[...] = (jnp.dot(z.astype(jnp.bfloat16), w_out_ref[...],
                          preferred_element_type=jnp.float32) + b_out_ref[...])


def _round_up(x, m):
    return ((x + m - 1) // m) * m


@functools.partial(jax.jit, static_argnames=("tile_b",))
def critic_forward(obs, action, params, tile_b=256):
    B, obs_dim = obs.shape
    act_dim = action.shape[1]
    H = params["w_tr"].shape[1]

    # Batch tile: multiple of 8, no bigger than the (padded) batch.
    tile_b = min(tile_b, _round_up(B, 8))
    grid = (pl.cdiv(B, tile_b),)

    # ---- parameter packing (glue; stays in plain JAX) ------------------------
    w_obs = params["w_tr"][:obs_dim, :]                 # (obs_dim, H)  f32
    w_act = params["w_tr"][obs_dim:, :]                 # (act_dim, H)  f32
    b_tr, ln_g, ln_b = params["b_tr"], params["ln_g"], params["ln_b"]

    # Fused first-layer weights of both heads: (H, 2H) in bf16.
    w_heads = jnp.concatenate([params["w1a"], params["w2a"]], axis=1).astype(jnp.bfloat16)
    b_heads = jnp.concatenate([params["b1a"], params["b2a"]], axis=1)   # (1, 2H) f32

    # Fused block-diagonal output weights: (2H, 2) in bf16, bias (1, 2) f32.
    zeros_col = jnp.zeros((H, 1), jnp.float32)
    w_out = jnp.concatenate(
        [jnp.concatenate([params["w1b"], zeros_col], axis=1),
         jnp.concatenate([zeros_col, params["w2b"]], axis=1)],
        axis=0).astype(jnp.bfloat16)                                     # (2H, 2)
    b_out = jnp.concatenate([params["b1b"], params["b2b"]], axis=1)      # (1, 2)

    def resident(arr):  # weights/biases: same block every grid step -> stay in VMEM
        return pl.BlockSpec(arr.shape, lambda i: (0, 0))

    in_specs = [
        pl.BlockSpec((tile_b, obs_dim), lambda i: (i, 0)),
        pl.BlockSpec((tile_b, act_dim), lambda i: (i, 0)),
        resident(w_obs), resident(w_act), resident(b_tr),
        resident(ln_g), resident(ln_b),
        resident(w_heads), resident(b_heads),
        resident(w_out), resident(b_out),
    ]
    out_specs = pl.BlockSpec((tile_b, 2), lambda i: (i, 0))

    q = pl.pallas_call(
        critic_kernel,
        out_shape=jax.ShapeDtypeStruct((B, 2), jnp.float32),
        grid=grid,
        in_specs=in_specs,
        out_specs=out_specs,
        compiler_params=pltpu.CompilerParams(
            dimension_semantics=("parallel",),      # shard batch over TCs (v7x)
            vmem_limit_bytes=32 * 1024 * 1024,      # safe on v5e/v6e/v7x
        ),
    )(obs, action, w_obs, w_act, b_tr, ln_g, ln_b, w_heads, b_heads, w_out, b_out)

    return q[:, 0:1], q[:, 1:2]


def make_params(key, in_dim, hidden_dim):
    """Deterministic synthetic parameters (shapes match nn.Linear / nn.LayerNorm)."""
    ks = jax.random.split(key, 10)
    scale = lambda d: 1.0 / jnp.sqrt(jnp.float32(d))
    return {
        # trunk Linear(in_dim, hidden) + LayerNorm(hidden)
        "w_tr": jax.random.normal(ks[0], (in_dim, hidden_dim), jnp.float32) * scale(in_dim),
        "b_tr": jax.random.normal(ks[1], (1, hidden_dim), jnp.float32) * 0.1,
        "ln_g": jnp.ones((1, hidden_dim), jnp.float32),
        "ln_b": jnp.zeros((1, hidden_dim), jnp.float32),
        # Q1: Linear(hidden, hidden) -> ReLU -> Linear(hidden, 1)
        "w1a": jax.random.normal(ks[2], (hidden_dim, hidden_dim), jnp.float32) * scale(hidden_dim),
        "b1a": jax.random.normal(ks[3], (1, hidden_dim), jnp.float32) * 0.1,
        "w1b": jax.random.normal(ks[4], (hidden_dim, 1), jnp.float32) * scale(hidden_dim),
        "b1b": jax.random.normal(ks[5], (1, 1), jnp.float32) * 0.1,
        # Q2: Linear(hidden, hidden) -> ReLU -> Linear(hidden, 1)
        "w2a": jax.random.normal(ks[6], (hidden_dim, hidden_dim), jnp.float32) * scale(hidden_dim),
        "b2a": jax.random.normal(ks[7], (1, hidden_dim), jnp.float32) * 0.1,
        "w2b": jax.random.normal(ks[8], (hidden_dim, 1), jnp.float32) * scale(hidden_dim),
        "b2b": jax.random.normal(ks[9], (1, 1), jnp.float32) * 0.1,
    }


def critic_forward_ref(obs, action, params):
    """Pure-JAX (f32) reference of the PyTorch forward (obs_type='states')."""
    x = jnp.concatenate([obs, action], axis=-1)
    h0 = x @ params["w_tr"] + params["b_tr"]
    mean = jnp.mean(h0, -1, keepdims=True)
    var = jnp.mean((h0 - mean) ** 2, -1, keepdims=True)
    h = jnp.tanh((h0 - mean) / jnp.sqrt(var + LN_EPS) * params["ln_g"] + params["ln_b"])
    q1 = jnp.maximum(h @ params["w1a"] + params["b1a"], 0.0) @ params["w1b"] + params["b1b"]
    q2 = jnp.maximum(h @ params["w2a"] + params["b2a"], 0.0) @ params["w2b"] + params["b2b"]
    return q1, q2


if __name__ == "__main__":
    # small shapes consistent with the module: obs_type='states'
    obs_dim, action_dim, hidden_dim = 24, 8, 128
    in_dim = obs_dim + action_dim

    key = jax.random.PRNGKey(0)
    k_obs, k_act, k_par = jax.random.split(key, 3)
    params = make_params(k_par, in_dim, hidden_dim)

    # --- small batch (single grid step) ---------------------------------------
    batch = 8
    obs = jax.random.normal(k_obs, (batch, obs_dim), jnp.float32)
    action = jax.random.normal(k_act, (batch, action_dim), jnp.float32)

    q1, q2 = critic_forward(obs, action, params)
    jax.block_until_ready((q1, q2))
    q1_ref, q2_ref = critic_forward_ref(obs, action, params)
    assert q1.shape == (batch, 1) and q2.shape == (batch, 1)
    # bf16 matmuls in the heads -> loosened tolerance vs the f32 reference.
    assert jnp.allclose(q1, q1_ref, atol=2e-2, rtol=2e-2)
    assert jnp.allclose(q2, q2_ref, atol=2e-2, rtol=2e-2)

    # --- multi-tile batch (exercises grid + padded last tile) -----------------
    batch2 = 40
    obs2 = jax.random.normal(jax.random.PRNGKey(1), (batch2, obs_dim), jnp.float32)
    act2 = jax.random.normal(jax.random.PRNGKey(2), (batch2, action_dim), jnp.float32)
    q1b, q2b = critic_forward(obs2, act2, params, tile_b=16)   # grid = (3,)
    jax.block_until_ready((q1b, q2b))
    q1b_ref, q2b_ref = critic_forward_ref(obs2, act2, params)
    assert jnp.allclose(q1b, q1b_ref, atol=2e-2, rtol=2e-2)
    assert jnp.allclose(q2b, q2b_ref, atol=2e-2, rtol=2e-2)

    print("KERNEL_OK")
</pallas_src>

<mosaic_0001>
module attributes {stable_mosaic.version = 11 : i64} {
  func.func @critic_kernel(%arg0: i32, %arg1: memref<8x24xf32, #tpu.memory_space<vmem>>, %arg2: memref<8x8xf32, #tpu.memory_space<vmem>>, %arg3: memref<24x128xf32, #tpu.memory_space<vmem>>, %arg4: memref<8x128xf32, #tpu.memory_space<vmem>>, %arg5: memref<1x128xf32, #tpu.memory_space<vmem>>, %arg6: memref<1x128xf32, #tpu.memory_space<vmem>>, %arg7: memref<1x128xf32, #tpu.memory_space<vmem>>, %arg8: memref<128x256xbf16, #tpu.memory_space<vmem>>, %arg9: memref<1x256xf32, #tpu.memory_space<vmem>>, %arg10: memref<256x2xbf16, #tpu.memory_space<vmem>>, %arg11: memref<1x2xf32, #tpu.memory_space<vmem>>, %arg12: memref<8x2xf32, #tpu.memory_space<vmem>>) attributes {dimension_semantics = [#tpu.dimension_semantics<parallel>], iteration_bounds = array<i64: 1>, scalar_prefetch = 0 : i64, scratch_operands = 0 : i64, tpu.core_type = #tpu.core_type<tc>, window_params = [{transform_indices = @transform_0, window_bounds = array<i64: 8, 24>}, {transform_indices = @transform_1, window_bounds = array<i64: 8, 8>}, {pipeline_mode = #tpu.pipeline_mode<synchronous>, transform_indices = @transform_2, window_bounds = array<i64: 24, 128>}, {pipeline_mode = #tpu.pipeline_mode<synchronous>, transform_indices = @transform_3, window_bounds = array<i64: 8, 128>}, {pipeline_mode = #tpu.pipeline_mode<synchronous>, transform_indices = @transform_4, window_bounds = array<i64: 1, 128>}, {pipeline_mode = #tpu.pipeline_mode<synchronous>, transform_indices = @transform_5, window_bounds = array<i64: 1, 128>}, {pipeline_mode = #tpu.pipeline_mode<synchronous>, transform_indices = @transform_6, window_bounds = array<i64: 1, 128>}, {pipeline_mode = #tpu.pipeline_mode<synchronous>, transform_indices = @transform_7, window_bounds = array<i64: 128, 256>}, {pipeline_mode = #tpu.pipeline_mode<synchronous>, transform_indices = @transform_8, window_bounds = array<i64: 1, 256>}, {pipeline_mode = #tpu.pipeline_mode<synchronous>, transform_indices = @transform_9, window_bounds = array<i64: 256, 2>}, {pipeline_mode = #tpu.pipeline_mode<synchronous>, transform_indices = @transform_10, window_bounds = array<i64: 1, 2>}, {transform_indices = @transform_11, window_bounds = array<i64: 8, 2>}]} {
    %c0 = arith.constant 0 : index
    %c0_0 = arith.constant 0 : index
    %0 = vector.load %arg1[%c0, %c0_0] : memref<8x24xf32, #tpu.memory_space<vmem>>, vector<8x24xf32>
    %c0_1 = arith.constant 0 : index
    %c0_2 = arith.constant 0 : index
    %1 = vector.load %arg3[%c0_1, %c0_2] : memref<24x128xf32, #tpu.memory_space<vmem>>, vector<24x128xf32>
    %cst = arith.constant dense<0.000000e+00> : vector<8x128xf32>
    %2 = tpu.matmul %0, %1, %cst {dimension_numbers = #tpu.dot_dimension_numbers<[1], [0], [0], [1], [0, 0, 1, 1], [], []>} : vector<8x24xf32>, vector<24x128xf32>, vector<8x128xf32> -> vector<8x128xf32>
    %c0_3 = arith.constant 0 : index
    %c0_4 = arith.constant 0 : index
    %3 = vector.load %arg2[%c0_3, %c0_4] : memref<8x8xf32, #tpu.memory_space<vmem>>, vector<8x8xf32>
    %c0_5 = arith.constant 0 : index
    %c0_6 = arith.constant 0 : index
    %4 = vector.load %arg4[%c0_5, %c0_6] : memref<8x128xf32, #tpu.memory_space<vmem>>, vector<8x128xf32>
    %cst_7 = arith.constant dense<0.000000e+00> : vector<8x128xf32>
    %5 = tpu.matmul %3, %4, %cst_7 {dimension_numbers = #tpu.dot_dimension_numbers<[1], [0], [0], [1], [0, 0, 1, 1], [], []>} : vector<8x8xf32>, vector<8x128xf32>, vector<8x128xf32> -> vector<8x128xf32>
    %6 = arith.addf %2, %5 : vector<8x128xf32>
    %c0_8 = arith.constant 0 : index
    %c0_9 = arith.constant 0 : index
    %7 = vector.load %arg5[%c0_8, %c0_9] : memref<1x128xf32, #tpu.memory_space<vmem>>, vector<1x128xf32>
    %8 = vector.broadcast %7 : vector<1x128xf32> to vector<8x128xf32>
    %9 = arith.addf %6, %8 : vector<8x128xf32>
    %cst_10 = arith.constant dense<0.000000e+00> : vector<8xf32>
    %10 = vector.multi_reduction <add>, %9, %cst_10 [1] : vector<8x128xf32> to vector<8xf32>
    %11 = vector.shape_cast %10 : vector<8xf32> to vector<8x1xf32>
    %12 = arith.mulf %9, %9 : vector<8x128xf32>
    %cst_11 = arith.constant dense<0.000000e+00> : vector<8xf32>
    %13 = vector.multi_reduction <add>, %12, %cst_11 [1] : vector<8x128xf32> to vector<8xf32>
    %14 = vector.shape_cast %13 : vector<8xf32> to vector<8x1xf32>
    %cst_12 = arith.constant 7.812500e-03 : f32
    %15 = vector.broadcast %cst_12 : f32 to vector<8x1xf32>
    %16 = arith.mulf %11, %15 : vector<8x1xf32>
    %cst_13 = arith.constant 7.812500e-03 : f32
    %17 = vector.broadcast %cst_13 : f32 to vector<8x1xf32>
    %18 = arith.mulf %14, %17 : vector<8x1xf32>
    %19 = arith.mulf %16, %16 : vector<8x1xf32>
    %20 = arith.subf %18, %19 : vector<8x1xf32>
    %cst_14 = arith.constant 0.000000e+00 : f32
    %21 = vector.broadcast %cst_14 : f32 to vector<8x1xf32>
    %22 = arith.maximumf %20, %21 : vector<8x1xf32>
    %23 = vector.broadcast %16 : vector<8x1xf32> to vector<8x128xf32>
    %24 = arith.subf %9, %23 : vector<8x128xf32>
    %cst_15 = arith.constant 9.99999974E-6 : f32
    %25 = vector.broadcast %cst_15 : f32 to vector<8x1xf32>
    %26 = arith.addf %22, %25 : vector<8x1xf32>
    %27 = math.rsqrt %26 : vector<8x1xf32>
    %28 = vector.broadcast %27 : vector<8x1xf32> to vector<8x128xf32>
    %29 = arith.mulf %24, %28 : vector<8x128xf32>
    %c0_16 = arith.constant 0 : index
    %c0_17 = arith.constant 0 : index
    %30 = vector.load %arg6[%c0_16, %c0_17] : memref<1x128xf32, #tpu.memory_space<vmem>>, vector<1x128xf32>
    %31 = vector.broadcast %30 : vector<1x128xf32> to vector<8x128xf32>
    %32 = arith.mulf %29, %31 : vector<8x128xf32>
    %c0_18 = arith.constant 0 : index
    %c0_19 = arith.constant 0 : index
    %33 = vector.load %arg7[%c0_18, %c0_19] : memref<1x128xf32, #tpu.memory_space<vmem>>, vector<1x128xf32>
    %34 = vector.broadcast %33 : vector<1x128xf32> to vector<8x128xf32>
    %35 = arith.addf %32, %34 : vector<8x128xf32>
    %36 = math.tanh %35 : vector<8x128xf32>
    %37 = arith.truncf %36 : vector<8x128xf32> to vector<8x128xbf16>
    %c0_20 = arith.constant 0 : index
    %c0_21 = arith.constant 0 : index
    %38 = vector.load %arg8[%c0_20, %c0_21] : memref<128x256xbf16, #tpu.memory_space<vmem>>, vector<128x256xbf16>
    %cst_22 = arith.constant dense<0.000000e+00> : vector<8x256xf32>
    %39 = tpu.matmul %37, %38, %cst_22 {dimension_numbers = #tpu.dot_dimension_numbers<[1], [0], [0], [1], [0, 0, 1, 1], [], []>} : vector<8x128xbf16>, vector<128x256xbf16>, vector<8x256xf32> -> vector<8x256xf32>
    %c0_23 = arith.constant 0 : index
    %c0_24 = arith.constant 0 : index
    %40 = vector.load %arg9[%c0_23, %c0_24] : memref<1x256xf32, #tpu.memory_space<vmem>>, vector<1x256xf32>
    %41 = vector.broadcast %40 : vector<1x256xf32> to vector<8x256xf32>
    %42 = arith.addf %39, %41 : vector<8x256xf32>
    %cst_25 = arith.constant 0.000000e+00 : f32
    %43 = vector.broadcast %cst_25 : f32 to vector<8x256xf32>
    %44 = arith.maximumf %42, %43 : vector<8x256xf32>
    %45 = arith.truncf %44 : vector<8x256xf32> to vector<8x256xbf16>
    %c0_26 = arith.constant 0 : index
    %c0_27 = arith.constant 0 : index
    %46 = vector.load %arg10[%c0_26, %c0_27] : memref<256x2xbf16, #tpu.memory_space<vmem>>, vector<256x2xbf16>
    %cst_28 = arith.constant dense<0.000000e+00> : vector<8x2xf32>
    %47 = tpu.matmul %45, %46, %cst_28 {dimension_numbers = #tpu.dot_dimension_numbers<[1], [0], [0], [1], [0, 0, 1, 1], [], []>} : vector<8x256xbf16>, vector<256x2xbf16>, vector<8x2xf32> -> vector<8x2xf32>
    %c0_29 = arith.constant 0 : index
    %c0_30 = arith.constant 0 : index
    %48 = vector.load %arg11[%c0_29, %c0_30] : memref<1x2xf32, #tpu.memory_space<vmem>>, vector<1x2xf32>
    %49 = vector.broadcast %48 : vector<1x2xf32> to vector<8x2xf32>
    %50 = arith.addf %47, %49 : vector<8x2xf32>
    %c0_31 = arith.constant 0 : index
    %c0_32 = arith.constant 0 : index
    %51 = vector.load %arg12[%c0_31, %c0_32] : memref<8x2xf32, #tpu.memory_space<vmem>>, vector<8x2xf32>
    tpu.vector_store %arg12[%c0_31, %c0_32], %50 {strides = array<i32>} : memref<8x2xf32, #tpu.memory_space<vmem>>, vector<8x2xf32>,
    return
  }
  func.func @transform_0(%arg0: i32) -> (i32, i32) {
    %c0_i32 = arith.constant 0 : i32
    %c0_i32_0 = arith.constant 0 : i32
    return %arg0, %c0_i32 : i32, i32
  }
  func.func @transform_1(%arg0: i32) -> (i32, i32) {
    %c0_i32 = arith.constant 0 : i32
    %c0_i32_0 = arith.constant 0 : i32
    return %arg0, %c0_i32 : i32, i32
  }
  func.func @transform_2(%arg0: i32) -> (i32, i32) {
    %c0_i32 = arith.constant 0 : i32
    %c0_i32_0 = arith.constant 0 : i32
    %c0_i32_1 = arith.constant 0 : i32
    return %c0_i32, %c0_i32_0 : i32, i32
  }
  func.func @transform_3(%arg0: i32) -> (i32, i32) {
    %c0_i32 = arith.constant 0 : i32
    %c0_i32_0 = arith.constant 0 : i32
    %c0_i32_1 = arith.constant 0 : i32
    return %c0_i32, %c0_i32_0 : i32, i32
  }
  func.func @transform_4(%arg0: i32) -> (i32, i32) {
    %c0_i32 = arith.constant 0 : i32
    %c0_i32_0 = arith.constant 0 : i32
    %c0_i32_1 = arith.constant 0 : i32
    return %c0_i32, %c0_i32_0 : i32, i32
  }
  func.func @transform_5(%arg0: i32) -> (i32, i32) {
    %c0_i32 = arith.constant 0 : i32
    %c0_i32_0 = arith.constant 0 : i32
    %c0_i32_1 = arith.constant 0 : i32
    return %c0_i32, %c0_i32_0 : i32, i32
  }
  func.func @transform_6(%arg0: i32) -> (i32, i32) {
    %c0_i32 = arith.constant 0 : i32
    %c0_i32_0 = arith.constant 0 : i32
    %c0_i32_1 = arith.constant 0 : i32
    return %c0_i32, %c0_i32_0 : i32, i32
  }
  func.func @transform_7(%arg0: i32) -> (i32, i32) {
    %c0_i32 = arith.constant 0 : i32
    %c0_i32_0 = arith.constant 0 : i32
    %c0_i32_1 = arith.constant 0 : i32
    return %c0_i32, %c0_i32_0 : i32, i32
  }
  func.func @transform_8(%arg0: i32) -> (i32, i32) {
    %c0_i32 = arith.constant 0 : i32
    %c0_i32_0 = arith.constant 0 : i32
    %c0_i32_1 = arith.constant 0 : i32
    return %c0_i32, %c0_i32_0 : i32, i32
  }
  func.func @transform_9(%arg0: i32) -> (i32, i32) {
    %c0_i32 = arith.constant 0 : i32
    %c0_i32_0 = arith.constant 0 : i32
    %c0_i32_1 = arith.constant 0 : i32
    return %c0_i32, %c0_i32_0 : i32, i32
  }
  func.func @transform_10(%arg0: i32) -> (i32, i32) {
    %c0_i32 = arith.constant 0 : i32
    %c0_i32_0 = arith.constant 0 : i32
    %c0_i32_1 = arith.constant 0 : i32
    return %c0_i32, %c0_i32_0 : i32, i32
  }
  func.func @transform_11(%arg0: i32) -> (i32, i32) {
    %c0_i32 = arith.constant 0 : i32
    %c0_i32_0 = arith.constant 0 : i32
    return %arg0, %c0_i32 : i32, i32
  }
}

</mosaic_0001>

<llo_original>
// kernel: critic_forward.1
$region0: #{critic_forward.1}
  #allocation0 [shape = 'u32[]', space=smem, size = 0x4, offset = 0x4, fixed_abs, tag = 'smem constant byte address 0x4 - core index']
  #allocation1 [shape = 'u32[72,128]{1,0:T(1,128)}', space=vmem, size = 0x9000, scoped, tag = 'internal scratch']
  %s0 = inlined_call_operand.vmem [shape: f32[8,24], index: 0, kind: input, shape index: {}]
  %s1 = inlined_call_operand.vmem [shape: f32[8,8], index: 1, kind: input, shape index: {}]
  %s2 = inlined_call_operand.vmem [shape: f32[24,128], index: 2, kind: input, shape index: {}]
  %s3 = inlined_call_operand.vmem [shape: f32[8,128], index: 3, kind: input, shape index: {}]
  %s4 = inlined_call_operand.vmem [shape: f32[1,128], index: 4, kind: input, shape index: {}]
  %s5 = inlined_call_operand.vmem [shape: f32[1,128], index: 5, kind: input, shape index: {}]
  %s6 = inlined_call_operand.vmem [shape: f32[1,128], index: 6, kind: input, shape index: {}]
  %s7 = inlined_call_operand.vmem [shape: bf16[128,256], index: 7, kind: input, shape index: {}]
  %s8 = inlined_call_operand.vmem [shape: f32[1,256], index: 8, kind: input, shape index: {}]
  %s9 = inlined_call_operand.vmem [shape: bf16[256,2], index: 9, kind: input, shape index: {}]
  %s10 = inlined_call_operand.vmem [shape: f32[1,2], index: 10, kind: input, shape index: {}]
  %s11 = inlined_call_operand.vmem [shape: f32[8,2], index: 11, kind: output, shape index: {}]
  %s12 = sld [smem:[#allocation0]]
  $region54: #{critic_forward.1} parent=0
    _
  %s14 = ssub.s32 1, %s12
  %s15 = scalar_select 0, %s14, %s12
  // Predicated region
  $region2: #{critic_forward.1} parent=0 // pred_check
    _
  $region3: #{critic_forward.1} parent=0 // pred_check_branch
    %17 = sbr.rel (0) target = $region5
  $region4: #{critic_forward.1} parent=0 // pred_region
    _
  $region5: #{critic_forward.1} parent=0 // pred_fallthru
    _
  // Predicated region
  $region6: #{critic_forward.1} parent=0 // pred_check
    _
  $region7: #{critic_forward.1} parent=0 // pred_check_branch
    %19 = sbr.rel (0) target = $region9
  $region8: #{critic_forward.1} parent=0 // pred_region
    _
  $region9: #{critic_forward.1} parent=0 // pred_fallthru
    _
  // Predicated region
  $region10: #{critic_forward.1} parent=0 // pred_check
    _
  $region11: #{critic_forward.1} parent=0 // pred_check_branch
    %21 = sbr.rel (0) target = $region13
  $region12: #{critic_forward.1} parent=0 // pred_region
    _
  $region13: #{critic_forward.1} parent=0 // pred_fallthru
    _
  // Predicated region
  $region14: #{critic_forward.1} parent=0 // pred_check
    _
  $region15: #{critic_forward.1} parent=0 // pred_check_branch
    %23 = sbr.rel (0) target = $region17
  $region16: #{critic_forward.1} parent=0 // pred_region
    _
  $region17: #{critic_forward.1} parent=0 // pred_fallthru
    _
  // Predicated region
  $region18: #{critic_forward.1} parent=0 // pred_check
    _
  $region19: #{critic_forward.1} parent=0 // pred_check_branch
    %25 = sbr.rel (0) target = $region21
  $region20: #{critic_forward.1} parent=0 // pred_region
    _
  $region21: #{critic_forward.1} parent=0 // pred_fallthru
    _
  // Predicated region
  $region22: #{critic_forward.1} parent=0 // pred_check
    _
  $region23: #{critic_forward.1} parent=0 // pred_check_branch
    %27 = sbr.rel (0) target = $region25
  $region24: #{critic_forward.1} parent=0 // pred_region
    _
  $region25: #{critic_forward.1} parent=0 // pred_fallthru
    _
  // Predicated region
  $region26: #{critic_forward.1} parent=0 // pred_check
    _
  $region27: #{critic_forward.1} parent=0 // pred_check_branch
    %29 = sbr.rel (0) target = $region29
  $region28: #{critic_forward.1} parent=0 // pred_region
    _
  $region29: #{critic_forward.1} parent=0 // pred_fallthru
    _
  // Predicated region
  $region30: #{critic_forward.1} parent=0 // pred_check
    _
  $region31: #{critic_forward.1} parent=0 // pred_check_branch
    %31 = sbr.rel (0) target = $region33
  $region32: #{critic_forward.1} parent=0 // pred_region
    _
  $region33: #{critic_forward.1} parent=0 // pred_fallthru
    _
  // Predicated region
  $region34: #{critic_forward.1} parent=0 // pred_check
    _
  $region35: #{critic_forward.1} parent=0 // pred_check_branch
    %33 = sbr.rel (0) target = $region37
  $region36: #{critic_forward.1} parent=0 // pred_region
    _
  $region37: #{critic_forward.1} parent=0 // pred_fallthru
    _
  // Predicated region
  $region38: #{critic_forward.1} parent=0 // pred_check
    _
  $region39: #{critic_forward.1} parent=0 // pred_check_branch
    %35 = sbr.rel (0) target = $region41
  $region40: #{critic_forward.1} parent=0 // pred_region
    _
  $region41: #{critic_forward.1} parent=0 // pred_fallthru
    _
  // Predicated region
  $region42: #{critic_forward.1} parent=0 // pred_check
    _
  $region43: #{critic_forward.1} parent=0 // pred_check_branch
    %37 = sbr.rel (0) target = $region45
  $region44: #{critic_forward.1} parent=0 // pred_region
    _
  $region45: #{critic_forward.1} parent=0 // pred_fallthru
    _
  %v38 = vld [vmem:[%s0] sm:$0xff]
  %v39 = vld [vmem:[%s2] sm:$0xff]
  %v40 = vld [vmem:[%s2 + $0x8] sm:$0xff]
  %v41 = vld [vmem:[%s2 + $0x10] sm:$0xff]
  %v42 = vld [vmem:[%s1] sm:$0xff]
  %v43 = vld [vmem:[%s3] sm:$0xff]
  %vm44 = vcmask 64512
  %v46 = vsel %vm44, %v42, 0
  %48 = vmatpush.msra.mxu0 0.0
  %49 = vmatpush.msra.mxu0 0.0
  %50 = vmatpush.msra.mxu0 0.0
  %51 = vmatpush.msra.mxu0 0.0
  %52 = vmatpush.msra.mxu0 0.0
  %53 = vmatpush.msra.mxu0 0.0
  %54 = vmatpush.msra.mxu0 0.0
  %55 = vmatpush.msra.mxu0 0.0
  %56 = vmatpush.msra.mxu0 0.0
  %57 = vmatpush.msra.mxu0 0.0
  %58 = vmatpush.msra.mxu0 0.0
  %59 = vmatpush.msra.mxu0 0.0
  %60 = vmatpush.msra.mxu0 0.0
  %61 = vmatpush.msra.mxu0 0.0
  %62 = vmatpush.msra.mxu0 0.0
  %63 = vmatpush.msra.mxu0 %v43
  %64 = vmatmul.f32.gmra.mxu0 %v46
  %v65 = vpop.f32.mrf.mxu0
  %v66 = vadd.f32 0.0, %v65
  %67 = vdwg.mxu0
  %vm68 = vcmask 195584
  %v70 = vsel %vm68, %v38, 0
  %72 = vmatpush.msra.mxu0 0.0
  %73 = vmatpush.msra.mxu0 0.0
  %74 = vmatpush.msra.mxu0 0.0
  %75 = vmatpush.msra.mxu0 0.0
  %76 = vmatpush.msra.mxu0 0.0
  %77 = vmatpush.msra.mxu0 0.0
  %78 = vmatpush.msra.mxu0 0.0
  %79 = vmatpush.msra.mxu0 0.0
  %80 = vmatpush.msra.mxu0 0.0
  %81 = vmatpush.msra.mxu0 0.0
  %82 = vmatpush.msra.mxu0 0.0
  %83 = vmatpush.msra.mxu0 0.0
  %84 = vmatpush.msra.mxu0 0.0
  %85 = vmatpush.msra.mxu0 %v41
  %86 = vmatpush.msra.mxu0 %v40
  %87 = vmatpush.msra.mxu0 %v39
  %88 = vmatmul.f32.gmra.mxu0 %v70
  %v89 = vpop.f32.mrf.mxu0
  %v90 = vadd.f32 %v66, %v89
  %91 = vdwg.mxu0
  %v92 = vld [vmem:[%s4] sm:$0x1]
  %v94 = vperm.slane %v92, 0
  %v96 = vadd.f32 %v90, %v94
  %97 = vadd.xlane.f32.xlu0 %v96
  %v98 = vpop.xlane.xlu0 %97
  %v99 = vmul.f32 %v96, %v96
  %100 = vadd.xlane.f32.xlu0 %v99
  %v101 = vpop.xlane.xlu0 %100
  %v102 = vmul.f32 %v98, 0.0078125
  %v103 = vmul.f32 %v101, 0.0078125
  %v104 = vmul.f32 %v102, %v102
  %v105 = vsub.f32 %v103, %v104
  %v106 = vmax.f32 %v105, 0.0
  %v107 = vsub.f32 %v96, %v102
  %v108 = vadd.f32 %v106, 1e-05
  %v109 = vrsqrt.pop %v108
  %v110 = vmul.f32 %v109, %v108
  %v111 = vmul.f32 %v110, %v109
  %v112 = vmul.f32 0.5, %v111
  %v113 = vsub.f32 1.5, %v112
  %v114 = vmul.f32 %v109, %v113
  %vm115 = vweird.f32 %v108
  %vm116 = vweird.f32 %v109
  %vm117 = vmor %vm115, %vm116
  %v118 = vsel %vm117, %v109, %v114
  %v119 = vmul.f32 %v107, %v118
  %v120 = vld [vmem:[%s5] sm:$0x1]
  %v122 = vperm.slane %v120, 0
  %v124 = vmul.f32 %v119, %v122
  %v125 = vld [vmem:[%s6] sm:$0x1]
  %v127 = vperm.slane %v125, 0
  %v129 = vadd.f32 %v124, %v127
  %v130 = vtanh.pop %v129
  %v131 = vpack.c.bf16 %v130, %v130
  %v132 = vld [vmem:[%s7] sm:$0xff]
  %v133 = vld [vmem:[%s7 + $0x8] sm:$0xff]
  %v134 = vld [vmem:[%s7 + $0x10] sm:$0xff]
  %v135 = vld [vmem:[%s7 + $0x18] sm:$0xff]
  %v136 = vld [vmem:[%s7 + $0x20] sm:$0xff]
  %v137 = vld [vmem:[%s7 + $0x28] sm:$0xff]
  %v138 = vld [vmem:[%s7 + $0x30] sm:$0xff]
  %v139 = vld [vmem:[%s7 + $0x38] sm:$0xff]
  %v140 = vld [vmem:[%s7 + $0x40] sm:$0xff]
  %v141 = vld [vmem:[%s7 + $0x48] sm:$0xff]
  %v142 = vld [vmem:[%s7 + $0x50] sm:$0xff]
  %v143 = vld [vmem:[%s7 + $0x58] sm:$0xff]
  %v144 = vld [vmem:[%s7 + $0x60] sm:$0xff]
  %v145 = vld [vmem:[%s7 + $0x68] sm:$0xff]
  %v146 = vld [vmem:[%s7 + $0x70] sm:$0xff]
  %v147 = vld [vmem:[%s7 + $0x78] sm:$0xff]
  %v148 = vld [vmem:[%s8] sm:$0x3]
  %v150 = vperm.slane %v148, 0
  %v151 = vperm.slane %v148, 1
  %v170 = vunpack.c.l.b16 %v132
  %v171 = vunpack.c.h.b16 %v132
  %v172 = vunpack.c.l.b16 %v133
  %v173 = vunpack.c.h.b16 %v133
  %v174 = vunpack.c.l.b16 %v134
  %v175 = vunpack.c.h.b16 %v134
  %v176 = vunpack.c.l.b16 %v135
  %v177 = vunpack.c.h.b16 %v135
  %v178 = vunpack.c.l.b16 %v136
  %v179 = vunpack.c.h.b16 %v136
  %v180 = vunpack.c.l.b16 %v137
  %v181 = vunpack.c.h.b16 %v137
  %v182 = vunpack.c.l.b16 %v138
  %v183 = vunpack.c.h.b16 %v138
  %v184 = vunpack.c.l.b16 %v139
  %v185 = vunpack.c.h.b16 %v139
  %v186 = vunpack.c.l.b16 %v140
  %v187 = vunpack.c.h.b16 %v140
  %v188 = vunpack.c.l.b16 %v141
  %v189 = vunpack.c.h.b16 %v141
  %v190 = vunpack.c.l.b16 %v142
  %v191 = vunpack.c.h.b16 %v142
  %v192 = vunpack.c.l.b16 %v143
  %v193 = vunpack.c.h.b16 %v143
  %v194 = vunpack.c.l.b16 %v144
  %v195 = vunpack.c.h.b16 %v144
  %v196 = vunpack.c.l.b16 %v145
  %v197 = vunpack.c.h.b16 %v145
  %v198 = vunpack.c.l.b16 %v146
  %v199 = vunpack.c.h.b16 %v146
  %v200 = vunpack.c.l.b16 %v147
  %v201 = vunpack.c.h.b16 %v147
  %v202 = vpack.c.b16 %v172, %v170
  %v203 = vpack.c.b16 %v173, %v171
  %v204 = vpack.c.b16 %v176, %v174
  %v205 = vpack.c.b16 %v177, %v175
  %v206 = vpack.c.b16 %v180, %v178
  %v207 = vpack.c.b16 %v181, %v179
  %v208 = vpack.c.b16 %v184, %v182
  %v209 = vpack.c.b16 %v185, %v183
  %v210 = vpack.c.b16 %v188, %v186
  %v211 = vpack.c.b16 %v189, %v187
  %v212 = vpack.c.b16 %v192, %v190
  %v213 = vpack.c.b16 %v193, %v191
  %v214 = vpack.c.b16 %v196, %v194
  %v215 = vpack.c.b16 %v197, %v195
  %v216 = vpack.c.b16 %v200, %v198
  %v217 = vpack.c.b16 %v201, %v199
  %234 = vmatpush.bf16.msra.mxu0 %v216
  %235 = vmatpush.bf16.msra.mxu0 %v214
  %236 = vmatpush.bf16.msra.mxu0 %v212
  %237 = vmatpush.bf16.msra.mxu0 %v210
  %238 = vmatpush.bf16.msra.mxu0 %v208
  %239 = vmatpush.bf16.msra.mxu0 %v206
  %240 = vmatpush.bf16.msra.mxu0 %v204
  %241 = vmatpush.bf16.msra.mxu0 %v202
  %242 = vmatmul.bf16.gmra.mxu0 %v131
  %v243 = vpop.f32.mrf.mxu0
  %v244 = vadd.f32 %v150, %v243
  %v245 = vpop.f32.mrf.mxu0
  %246 = vdwg.mxu0
  %247 = vmatpush.bf16.msra.mxu0 %v217
  %248 = vmatpush.bf16.msra.mxu0 %v215
  %249 = vmatpush.bf16.msra.mxu0 %v213
  %250 = vmatpush.bf16.msra.mxu0 %v211
  %251 = vmatpush.bf16.msra.mxu0 %v209
  %252 = vmatpush.bf16.msra.mxu0 %v207
  %253 = vmatpush.bf16.msra.mxu0 %v205
  %254 = vmatpush.bf16.msra.mxu0 %v203
  %255 = vmatmul.bf16.gmra.mxu0 %v131
  %v256 = vpop.f32.mrf.mxu0
  %v257 = vadd.f32 %v151, %v256
  %v258 = vpop.f32.mrf.mxu0
  %259 = vdwg.mxu0
  %v260 = vmax.f32 %v244, 0.0
  %v261 = vmax.f32 %v257, 0.0
  %v262 = vpack.c.bf16 %v260, %v260
  %v263 = vpack.c.bf16 %v261, %v261
  %v264 = vld [vmem:[%s9] sm:$0xf]
  %v265 = vld [vmem:[%s9 + $0x4] sm:$0xf]
  %v266 = vld [vmem:[%s9 + $0x8] sm:$0xf]
  %v267 = vld [vmem:[%s9 + $0xc] sm:$0xf]
  %v268 = vld [vmem:[%s9 + $0x10] sm:$0xf]
  %v269 = vld [vmem:[%s9 + $0x14] sm:$0xf]
  %v270 = vld [vmem:[%s9 + $0x18] sm:$0xf]
  %v271 = vld [vmem:[%s9 + $0x1c] sm:$0xf]
  %v272 = vld [vmem:[%s9 + $0x20] sm:$0xf]
  %v273 = vld [vmem:[%s9 + $0x24] sm:$0xf]
  %v274 = vld [vmem:[%s9 + $0x28] sm:$0xf]
  %v275 = vld [vmem:[%s9 + $0x2c] sm:$0xf]
  %v276 = vld [vmem:[%s9 + $0x30] sm:$0xf]
  %v277 = vld [vmem:[%s9 + $0x34] sm:$0xf]
  %v278 = vld [vmem:[%s9 + $0x38] sm:$0xf]
  %v279 = vld [vmem:[%s9 + $0x3c] sm:$0xf]
  %v280 = vld [vmem:[%s9 + $0x40] sm:$0xf]
  %v281 = vld [vmem:[%s9 + $0x44] sm:$0xf]
  %v282 = vld [vmem:[%s9 + $0x48] sm:$0xf]
  %v283 = vld [vmem:[%s9 + $0x4c] sm:$0xf]
  %v284 = vld [vmem:[%s9 + $0x50] sm:$0xf]
  %v285 = vld [vmem:[%s9 + $0x54] sm:$0xf]
  %v286 = vld [vmem:[%s9 + $0x58] sm:$0xf]
  %v287 = vld [vmem:[%s9 + $0x5c] sm:$0xf]
  %v288 = vld [vmem:[%s9 + $0x60] sm:$0xf]
  %v289 = vld [vmem:[%s9 + $0x64] sm:$0xf]
  %v290 = vld [vmem:[%s9 + $0x68] sm:$0xf]
  %v291 = vld [vmem:[%s9 + $0x6c] sm:$0xf]
  %v292 = vld [vmem:[%s9 + $0x70] sm:$0xf]
  %v293 = vld [vmem:[%s9 + $0x74] sm:$0xf]
  %v294 = vld [vmem:[%s9 + $0x78] sm:$0xf]
  %v295 = vld [vmem:[%s9 + $0x7c] sm:$0xf]
  %v296 = vld [vmem:[%s10] sm:$0x1]
  %v298 = vperm.slane %v296, 0
  %v332 = vunpack.c.l.b16 %v264
  %v333 = vunpack.c.l.b16 %v265
  %v334 = vunpack.c.l.b16 %v266
  %v335 = vunpack.c.l.b16 %v267
  %v336 = vunpack.c.l.b16 %v268
  %v337 = vunpack.c.l.b16 %v269
  %v338 = vunpack.c.l.b16 %v270
  %v339 = vunpack.c.l.b16 %v271
  %v340 = vunpack.c.l.b16 %v272
  %v341 = vunpack.c.l.b16 %v273
  %v342 = vunpack.c.l.b16 %v274
  %v343 = vunpack.c.l.b16 %v275
  %v344 = vunpack.c.l.b16 %v276
  %v345 = vunpack.c.l.b16 %v277
  %v346 = vunpack.c.l.b16 %v278
  %v347 = vunpack.c.l.b16 %v279
  %v348 = vunpack.c.l.b16 %v280
  %v349 = vunpack.c.l.b16 %v281
  %v350 = vunpack.c.l.b16 %v282
  %v351 = vunpack.c.l.b16 %v283
  %v352 = vunpack.c.l.b16 %v284
  %v353 = vunpack.c.l.b16 %v285
  %v354 = vunpack.c.l.b16 %v286
  %v355 = vunpack.c.l.b16 %v287
  %v356 = vunpack.c.l.b16 %v288
  %v357 = vunpack.c.l.b16 %v289
  %v358 = vunpack.c.l.b16 %v290
  %v359 = vunpack.c.l.b16 %v291
  %v360 = vunpack.c.l.b16 %v292
  %v361 = vunpack.c.l.b16 %v293
  %v362 = vunpack.c.l.b16 %v294
  %v363 = vunpack.c.l.b16 %v295
  %v364 = vpack.c.b16 %v333, %v332
  %v365 = vpack.c.b16 %v335, %v334
  %v366 = vpack.c.b16 %v337, %v336
  %v367 = vpack.c.b16 %v339, %v338
  %v368 = vpack.c.b16 %v341, %v340
  %v369 = vpack.c.b16 %v343, %v342
  %v370 = vpack.c.b16 %v345, %v344
  %v371 = vpack.c.b16 %v347, %v346
  %v372 = vpack.c.b16 %v349, %v348
  %v373 = vpack.c.b16 %v351, %v350
  %v374 = vpack.c.b16 %v353, %v352
  %v375 = vpack.c.b16 %v355, %v354
  %v376 = vpack.c.b16 %v357, %v356
  %v377 = vpack.c.b16 %v359, %v358
  %v378 = vpack.c.b16 %v361, %v360
  %v379 = vpack.c.b16 %v363, %v362
  %396 = vmatpush.bf16.msra.mxu0 %v371
  %397 = vmatpush.bf16.msra.mxu0 %v370
  %398 = vmatpush.bf16.msra.mxu0 %v369
  %399 = vmatpush.bf16.msra.mxu0 %v368
  %400 = vmatpush.bf16.msra.mxu0 %v367
  %401 = vmatpush.bf16.msra.mxu0 %v366
  %402 = vmatpush.bf16.msra.mxu0 %v365
  %403 = vmatpush.bf16.msra.mxu0 %v364
  %404 = vmatmul.bf16.gmra.mxu0 %v262
  %v405 = vpop.f32.mrf.mxu0
  %v406 = vadd.f32 %v298, %v405
  %v407 = vpop.f32.mrf.mxu0
  %408 = vdwg.mxu0
  %409 = vmatpush.bf16.msra.mxu0 %v379
  %410 = vmatpush.bf16.msra.mxu0 %v378
  %411 = vmatpush.bf16.msra.mxu0 %v377
  %412 = vmatpush.bf16.msra.mxu0 %v376
  %413 = vmatpush.bf16.msra.mxu0 %v375
  %414 = vmatpush.bf16.msra.mxu0 %v374
  %415 = vmatpush.bf16.msra.mxu0 %v373
  %416 = vmatpush.bf16.msra.mxu0 %v372
  %417 = vmatmul.bf16.gmra.mxu0 %v263
  %v418 = vpop.f32.mrf.mxu0
  %v419 = vadd.f32 %v406, %v418
  %v420 = vpop.f32.mrf.mxu0
  %421 = vdwg.mxu0
  %vm422 = vcmask 15360
  %423 = vst.msk [vmem:[%s11] sm:$0xff] %vm422, %v419
  // Predicated region
  $region46: #{critic_forward.1} parent=0 // pred_check
    _
  $region47: #{critic_forward.1} parent=0 // pred_check_branch
    %425 = sbr.rel (0) target = $region49
  $region48: #{critic_forward.1} parent=0 // pred_region
    _
  $region49: #{critic_forward.1} parent=0 // pred_fallthru
    _
  // Predicated region
  $region50: #{critic_forward.1} parent=0 // pred_check
    _
  $region51: #{critic_forward.1} parent=0 // pred_check_branch
    %427 = sbr.rel (0) target = $region53
  $region52: #{critic_forward.1} parent=0 // pred_region
    _
  $region53: #{critic_forward.1} parent=0 // pred_fallthru
    _

</llo_original>
